<compile_context>
chip_gen: v6e
topology: v6e:2x2x1
jax: 0.10.0
libtpu: 0.0.40
codegen_flags: <defaults>
</compile_context>

<pallas_src>
import functools

import jax
import jax.numpy as jnp
from jax.experimental import pallas as pl
from jax.experimental.pallas import tpu as pltpu


def _round_up(x, m):
    return ((x + m - 1) // m) * m


def _conv1x1_sigmoid_kernel(x_ref, w_ref, b_ref, o_ref):
    # x_ref: (TM, C_in) f32, w_ref: (C_in, C_out_pad) bf16,
    # b_ref: (1, C_out_pad) f32, o_ref: (TM, C_out_pad) f32.
    # Cast x to bf16 in-kernel (VPU op hidden under MXU/DMA slack); accumulate in f32.
    acc = jnp.dot(x_ref[...].astype(w_ref.dtype), w_ref[...],
                  preferred_element_type=jnp.float32)
    acc = acc + b_ref[...]
    # sigmoid(x) == 0.5 * tanh(0.5 * x) + 0.5 : a single EUP transcendental per element.
    o_ref[...] = (0.5 * jnp.tanh(0.5 * acc) + 0.5).astype(o_ref.dtype)


def prepare_conv1x1_params(weight, bias, *, compute_dtype=jnp.bfloat16, lane=128):
    """One-time weight prep (do NOT redo per call):
    (C_out, C_in, 1, 1) -> (C_in, C_out_pad) bf16 weight and (1, C_out_pad) f32 bias."""
    C_out, C_in = int(weight.shape[0]), int(weight.shape[1])
    C_out_pad = _round_up(C_out, lane)
    w2d = jnp.transpose(weight.reshape(C_out, C_in)).astype(compute_dtype)   # (C_in, C_out)
    w2d = jnp.pad(w2d, ((0, 0), (0, C_out_pad - C_out)))
    b2d = jnp.pad(bias.reshape(1, C_out).astype(jnp.float32),
                  ((0, 0), (0, C_out_pad - C_out)))
    return w2d, b2d, C_out


def conv1x1_sigmoid(x_nchw, w2d, b2d, C_out, *, tm=512):
    """x_nchw: (N, C_in, H, W) f32; w2d: (C_in, C_out_pad) bf16 (pre-prepared);
    b2d: (1, C_out_pad) f32. Returns (N, C_out, H, W) in x's dtype."""
    N, C_in, H, W = x_nchw.shape
    C_out_pad = w2d.shape[1]
    M = N * H * W
    out_dtype = x_nchw.dtype
    hw1 = (H == 1 and W == 1)

    # NCHW -> (M, C_in). At H=W=1 this is a pure metadata reshape (no data movement).
    if hw1:
        x2d = x_nchw.reshape(M, C_in)
    else:
        x2d = jnp.transpose(x_nchw, (0, 2, 3, 1)).reshape(M, C_in)

    if M <= tm:
        # Small-M fast path (actual workload: M=1). Full-extent first block dim is legal
        # even when not a multiple of 8 -> no row padding, no jnp.pad op, single grid step.
        TM, M_pad, grid = M, M, (1,)
    else:
        # Large-M: tile rows. TM<=512 is safe on every generation (v7x has only 64 MiB VMEM;
        # v5e/v6e could go to 1024-2048 with a raised vmem limit if ever needed).
        TM = min(tm, 512)
        M_pad = _round_up(M, TM)
        grid = (M_pad // TM,)
        if M_pad != M:
            x2d = jnp.pad(x2d, ((0, M_pad - M), (0, 0)))

    cost = pl.CostEstimate(
        flops=2 * M * C_in * C_out,
        transcendentals=M * C_out,   # one tanh per output element
        bytes_accessed=int(x2d.size * x2d.dtype.itemsize
                           + w2d.size * w2d.dtype.itemsize
                           + b2d.size * b2d.dtype.itemsize
                           + M_pad * C_out_pad * jnp.dtype(out_dtype).itemsize),
    )

    # Note: weight/bias index_maps are constant, so their tiles are re-used across grid
    # steps; at grid=(1,) there is a single step anyway.
    out2d = pl.pallas_call(
        _conv1x1_sigmoid_kernel,
        out_shape=jax.ShapeDtypeStruct((M_pad, C_out_pad), out_dtype),
        grid_spec=pltpu.PrefetchScalarGridSpec(
            num_scalar_prefetch=0,
            grid=grid,
            in_specs=[
                pl.BlockSpec((TM, C_in), lambda i: (i, 0)),
                pl.BlockSpec((C_in, C_out_pad), lambda i: (0, 0)),
                pl.BlockSpec((1, C_out_pad), lambda i: (0, 0)),
            ],
            out_specs=pl.BlockSpec((TM, C_out_pad), lambda i: (i, 0)),
        ),
        compiler_params=pltpu.CompilerParams(
            dimension_semantics=("parallel",)),
        cost_estimate=cost,
    )(x2d, w2d, b2d)

    # Strip padded columns (they hold sigmoid(0)=0.5, NOT zeros) / padded rows, restore NCHW
    # with the minimum number of wrapper ops.
    if hw1:
        # (M, C_out) == (N, C_out) -> (N, C_out, 1, 1): one slice + one metadata reshape.
        return out2d[:M, :C_out].reshape(N, C_out, 1, 1)
    out2d = out2d[:M, :C_out]
    return jnp.transpose(out2d.reshape(N, H, W, C_out), (0, 3, 1, 2))


if __name__ == "__main__":
    key = jax.random.PRNGKey(0)
    k_x, k_w, k_b = jax.random.split(key, 3)

    # Shapes from the PyTorch module: Conv2d(56, 1344, 1, 1) on input (1, 56, 1, 1).
    N, C_in, C_out, H, W = 1, 56, 1344, 1, 1

    x = jax.random.normal(k_x, (N, C_in, H, W), dtype=jnp.float32)
    weight = jax.random.normal(k_w, (C_out, C_in, 1, 1), dtype=jnp.float32) * 0.05
    bias = jax.random.normal(k_b, (C_out,), dtype=jnp.float32) * 0.05

    # One-time parameter prep (transpose + pad + bf16 cast) outside the per-call path.
    w2d, b2d, c_out = prepare_conv1x1_params(weight, bias)

    fwd = jax.jit(functools.partial(conv1x1_sigmoid, C_out=c_out))
    out = fwd(x, w2d, b2d)
    out = jax.block_until_ready(out)

    # Reference in plain f32 JAX (tolerance loosened for bf16 weights).
    ref = jax.nn.sigmoid(
        jnp.einsum("nchw,oc->nohw", x, weight.reshape(C_out, C_in))
        + bias.reshape(1, C_out, 1, 1)
    )
    assert out.shape == (N, C_out, H, W)
    assert jnp.allclose(out, ref, atol=2e-2, rtol=2e-2), float(jnp.max(jnp.abs(out - ref)))

    print("KERNEL_OK")
</pallas_src>

<mosaic_0001>
module attributes {stable_mosaic.version = 11 : i64} {
  func.func @_conv1x1_sigmoid_kernel(%arg0: i32, %arg1: memref<1x56xf32, #tpu.memory_space<vmem>>, %arg2: memref<56x1408xbf16, #tpu.memory_space<vmem>>, %arg3: memref<1x1408xf32, #tpu.memory_space<vmem>>, %arg4: memref<1x1408xf32, #tpu.memory_space<vmem>>) attributes {dimension_semantics = [#tpu.dimension_semantics<parallel>], iteration_bounds = array<i64: 1>, scalar_prefetch = 0 : i64, scratch_operands = 0 : i64, tpu.core_type = #tpu.core_type<tc>, window_params = [{transform_indices = @transform_0, window_bounds = array<i64: 1, 56>}, {pipeline_mode = #tpu.pipeline_mode<synchronous>, transform_indices = @transform_1, window_bounds = array<i64: 56, 1408>}, {pipeline_mode = #tpu.pipeline_mode<synchronous>, transform_indices = @transform_2, window_bounds = array<i64: 1, 1408>}, {transform_indices = @transform_3, window_bounds = array<i64: 1, 1408>}]} {
    %c0 = arith.constant 0 : index
    %c0_0 = arith.constant 0 : index
    %0 = vector.load %arg1[%c0, %c0_0] : memref<1x56xf32, #tpu.memory_space<vmem>>, vector<1x56xf32>
    %1 = arith.truncf %0 : vector<1x56xf32> to vector<1x56xbf16>
    %c0_1 = arith.constant 0 : index
    %c0_2 = arith.constant 0 : index
    %2 = vector.load %arg2[%c0_1, %c0_2] : memref<56x1408xbf16, #tpu.memory_space<vmem>>, vector<56x1408xbf16>
    %cst = arith.constant dense<0.000000e+00> : vector<1x1408xf32>
    %3 = tpu.matmul %1, %2, %cst {dimension_numbers = #tpu.dot_dimension_numbers<[1], [0], [0], [1], [0, 0, 1, 1], [], []>} : vector<1x56xbf16>, vector<56x1408xbf16>, vector<1x1408xf32> -> vector<1x1408xf32>
    %c0_3 = arith.constant 0 : index
    %c0_4 = arith.constant 0 : index
    %4 = vector.load %arg3[%c0_3, %c0_4] : memref<1x1408xf32, #tpu.memory_space<vmem>>, vector<1x1408xf32>
    %5 = arith.addf %3, %4 : vector<1x1408xf32>
    %cst_5 = arith.constant 5.000000e-01 : f32
    %6 = vector.broadcast %cst_5 : f32 to vector<1x1408xf32>
    %7 = arith.mulf %6, %5 : vector<1x1408xf32>
    %8 = math.tanh %7 : vector<1x1408xf32>
    %cst_6 = arith.constant 5.000000e-01 : f32
    %9 = vector.broadcast %cst_6 : f32 to vector<1x1408xf32>
    %10 = arith.mulf %9, %8 : vector<1x1408xf32>
    %cst_7 = arith.constant 5.000000e-01 : f32
    %11 = vector.broadcast %cst_7 : f32 to vector<1x1408xf32>
    %12 = arith.addf %10, %11 : vector<1x1408xf32>
    %c0_8 = arith.constant 0 : index
    %c0_9 = arith.constant 0 : index
    %13 = vector.load %arg4[%c0_8, %c0_9] : memref<1x1408xf32, #tpu.memory_space<vmem>>, vector<1x1408xf32>
    tpu.vector_store %arg4[%c0_8, %c0_9], %12 {strides = array<i32>} : memref<1x1408xf32, #tpu.memory_space<vmem>>, vector<1x1408xf32>,
    return
  }
  func.func @transform_0(%arg0: i32) -> (i32, i32) {
    %c0_i32 = arith.constant 0 : i32
    %c0_i32_0 = arith.constant 0 : i32
    return %arg0, %c0_i32 : i32, i32
  }
  func.func @transform_1(%arg0: i32) -> (i32, i32) {
    %c0_i32 = arith.constant 0 : i32
    %c0_i32_0 = arith.constant 0 : i32
    %c0_i32_1 = arith.constant 0 : i32
    return %c0_i32, %c0_i32_0 : i32, i32
  }
  func.func @transform_2(%arg0: i32) -> (i32, i32) {
    %c0_i32 = arith.constant 0 : i32
    %c0_i32_0 = arith.constant 0 : i32
    %c0_i32_1 = arith.constant 0 : i32
    return %c0_i32, %c0_i32_0 : i32, i32
  }
  func.func @transform_3(%arg0: i32) -> (i32, i32) {
    %c0_i32 = arith.constant 0 : i32
    %c0_i32_0 = arith.constant 0 : i32
    return %arg0, %c0_i32 : i32, i32
  }
}

</mosaic_0001>

<llo_original>
// kernel: conv1x1_sigmoid.1
$region0: #{conv1x1_sigmoid.1}
  #allocation0 [shape = 'u32[]', space=smem, size = 0x4, offset = 0x4, fixed_abs, tag = 'smem constant byte address 0x4 - core index']
  #allocation1 [shape = 'u32[144,128]{1,0:T(1,128)}', space=vmem, size = 0x12000, scoped, tag = 'internal scratch']
  %s0 = inlined_call_operand.vmem [shape: f32[1,56], index: 0, kind: input, shape index: {}]
  %s1 = inlined_call_operand.hbm [shape: bf16[56,1408], index: 1, kind: input, shape index: {}]
  %s2 = inlined_call_operand.hbm [shape: f32[1,1408], index: 2, kind: input, shape index: {}]
  %s3 = inlined_call_operand.vmem [shape: f32[1,1408], index: 3, kind: output, shape index: {}]
  %s4 = sld [smem:[#allocation0]]
  $region30: #{conv1x1_sigmoid.1} parent=0
    _
  %s6 = ssub.s32 1, %s4
  %s7 = scalar_select 0, %s6, %s4
  $region1: #{conv1x1_sigmoid.1} parent=0
    #allocation2 [shape = 'u8[157696]{0}', space=vmem, size = 0x26800, scoped, tag = 'input window, operand 1, single buffered']
    #allocation3 [shape = 's32[1]{0}', space=sflag, size = 0x4, scoped, tag = 'scoped memory for conv1x1_sigmoid.1']
    #allocation4 [shape = 'u8[5632]{0}', space=vmem, size = 0x1800, scoped, tag = 'input window, operand 2, single buffered']
    #allocation5 [shape = 's32[1]{0}', space=sflag, size = 0x4, scoped, tag = 'scoped memory for conv1x1_sigmoid.1']
    %8 = vsyncpa [#allocation3], 0
    %9 = vsyncpa [#allocation5], 0
    // Predicated region
    $region2: #{conv1x1_sigmoid.1} parent=1 // pred_check
      _
    $region3: #{conv1x1_sigmoid.1} parent=1 // pred_check_branch
      %11 = sbr.rel (0) target = $region5
    $region4: #{conv1x1_sigmoid.1} parent=1 // pred_region
      _
    $region5: #{conv1x1_sigmoid.1} parent=1 // pred_fallthru
      _
    // Predicated region
    $region6: #{conv1x1_sigmoid.1} parent=1 // pred_check
      _
    $region7: #{conv1x1_sigmoid.1} parent=1 // pred_check_branch
      %13 = sbr.rel (0) target = $region9
    $region8: #{conv1x1_sigmoid.1} parent=1 // pred_region
      %s15 = ssub.s32 4928, 4928
      %16 = vsyncadd [#allocation3], %s15
      %s17 = sshll.u32 [#allocation2], 4
      %s18 = int_to_ptr.vmem [resolvable:$true] %s17
      %23 = dma.hbm_to_vmem [thread:$0]  %s1, 4928, %s18, [#allocation3], 704, 704, 44
    $region9: #{conv1x1_sigmoid.1} parent=1 // pred_fallthru
      _
    // Predicated region
    $region10: #{conv1x1_sigmoid.1} parent=1 // pred_check
      _
    $region11: #{conv1x1_sigmoid.1} parent=1 // pred_check_branch
      %25 = sbr.rel (0) target = $region13
    $region12: #{conv1x1_sigmoid.1} parent=1 // pred_region
      %s27 = ssub.s32 176, 176
      %28 = vsyncadd [#allocation5], %s27
      %s30 = sshll.u32 [#allocation4], 4
      %s31 = int_to_ptr.vmem [resolvable:$true] %s30
      %33 = dma.hbm_to_vmem [thread:$0]  %s2, 176, %s31, [#allocation5]
    $region13: #{conv1x1_sigmoid.1} parent=1 // pred_fallthru
      _
    // Predicated region
    $region14: #{conv1x1_sigmoid.1} parent=1 // pred_check
      _
    $region15: #{conv1x1_sigmoid.1} parent=1 // pred_check_branch
      %35 = sbr.rel (0) target = $region17
    $region16: #{conv1x1_sigmoid.1} parent=1 // pred_region
      %36 = dma.done [#allocation3], 4928
    $region17: #{conv1x1_sigmoid.1} parent=1 // pred_fallthru
      _
    // Predicated region
    $region18: #{conv1x1_sigmoid.1} parent=1 // pred_check
      _
    $region19: #{conv1x1_sigmoid.1} parent=1 // pred_check_branch
      %38 = sbr.rel (0) target = $region21
    $region20: #{conv1x1_sigmoid.1} parent=1 // pred_region
      %39 = dma.done [#allocation5], 176
    $region21: #{conv1x1_sigmoid.1} parent=1 // pred_fallthru
      _
    %v41 = vld [vmem:[%s0] sm:$0x1]
    %v42 = vpack.c.bf16 %v41, %v41
    %v43 = vld [vmem:[#allocation2] sm:$0xff]
    %v44 = vld [vmem:[#allocation2 + $0x8] sm:$0xff]
    %v45 = vld [vmem:[#allocation2 + $0x10] sm:$0xff]
    %v46 = vld [vmem:[#allocation2 + $0x18] sm:$0xff]
    %v47 = vld [vmem:[#allocation2 + $0x20] sm:$0xff]
    %v48 = vld [vmem:[#allocation2 + $0x28] sm:$0xf]
    %v49 = vld [vmem:[#allocation2 + $0x2c] sm:$0xff]
    %v50 = vld [vmem:[#allocation2 + $0x34] sm:$0xff]
    %v51 = vld [vmem:[#allocation2 + $0x3c] sm:$0xff]
    %v52 = vld [vmem:[#allocation2 + $0x44] sm:$0xff]
    %v53 = vld [vmem:[#allocation2 + $0x4c] sm:$0xff]
    %v54 = vld [vmem:[#allocation2 + $0x54] sm:$0xf]
    %v55 = vld [vmem:[#allocation2 + $0x58] sm:$0xff]
    %v56 = vld [vmem:[#allocation2 + $0x60] sm:$0xff]
    %v57 = vld [vmem:[#allocation2 + $0x68] sm:$0xff]
    %v58 = vld [vmem:[#allocation2 + $0x70] sm:$0xff]
    %v59 = vld [vmem:[#allocation2 + $0x78] sm:$0xff]
    %v60 = vld [vmem:[#allocation2 + $0x80] sm:$0xf]
    %v61 = vld [vmem:[#allocation2 + $0x84] sm:$0xff]
    %v62 = vld [vmem:[#allocation2 + $0x8c] sm:$0xff]
    %v63 = vld [vmem:[#allocation2 + $0x94] sm:$0xff]
    %v64 = vld [vmem:[#allocation2 + $0x9c] sm:$0xff]
    %v65 = vld [vmem:[#allocation2 + $0xa4] sm:$0xff]
    %v66 = vld [vmem:[#allocation2 + $0xac] sm:$0xf]
    %v67 = vld [vmem:[#allocation2 + $0xb0] sm:$0xff]
    %v68 = vld [vmem:[#allocation2 + $0xb8] sm:$0xff]
    %v69 = vld [vmem:[#allocation2 + $0xc0] sm:$0xff]
    %v70 = vld [vmem:[#allocation2 + $0xc8] sm:$0xff]
    %v71 = vld [vmem:[#allocation2 + $0xd0] sm:$0xff]
    %v72 = vld [vmem:[#allocation2 + $0xd8] sm:$0xf]
    %v73 = vld [vmem:[#allocation2 + $0xdc] sm:$0xff]
    %v74 = vld [vmem:[#allocation2 + $0xe4] sm:$0xff]
    %v75 = vld [vmem:[#allocation2 + $0xec] sm:$0xff]
    %v76 = vld [vmem:[#allocation2 + $0xf4] sm:$0xff]
    %v77 = vld [vmem:[#allocation2 + $0xfc] sm:$0xff]
    %v78 = vld [vmem:[#allocation2 + $0x104] sm:$0xf]
    %v79 = vld [vmem:[#allocation2 + $0x108] sm:$0xff]
    %v80 = vld [vmem:[#allocation2 + $0x110] sm:$0xff]
    %v81 = vld [vmem:[#allocation2 + $0x118] sm:$0xff]
    %v82 = vld [vmem:[#allocation2 + $0x120] sm:$0xff]
    %v83 = vld [vmem:[#allocation2 + $0x128] sm:$0xff]
    %v84 = vld [vmem:[#allocation2 + $0x130] sm:$0xf]
    %v85 = vld [vmem:[#allocation4] sm:$0xff]
    %v86 = vld [vmem:[#allocation4 + $0x8] sm:$0x7]
    %v129 = vunpack.c.l.b16 %v43
    %v130 = vunpack.c.h.b16 %v43
    %v131 = vunpack.c.l.b16 %v44
    %v132 = vunpack.c.h.b16 %v44
    %v133 = vunpack.c.l.b16 %v45
    %v134 = vunpack.c.h.b16 %v45
    %v135 = vunpack.c.l.b16 %v46
    %v136 = vunpack.c.h.b16 %v46
    %v137 = vunpack.c.l.b16 %v47
    %v138 = vunpack.c.h.b16 %v47
    %v139 = vunpack.c.l.b16 %v48
    %v140 = vunpack.c.l.b16 %v49
    %v141 = vunpack.c.h.b16 %v49
    %v142 = vunpack.c.l.b16 %v50
    %v143 = vunpack.c.h.b16 %v50
    %v144 = vunpack.c.l.b16 %v51
    %v145 = vunpack.c.h.b16 %v51
    %v146 = vunpack.c.l.b16 %v52
    %v147 = vunpack.c.h.b16 %v52
    %v148 = vunpack.c.l.b16 %v53
    %v149 = vunpack.c.h.b16 %v53
    %v150 = vunpack.c.l.b16 %v54
    %v151 = vunpack.c.l.b16 %v55
    %v152 = vunpack.c.h.b16 %v55
    %v153 = vunpack.c.l.b16 %v56
    %v154 = vunpack.c.h.b16 %v56
    %v155 = vunpack.c.l.b16 %v57
    %v156 = vunpack.c.h.b16 %v57
    %v157 = vunpack.c.l.b16 %v58
    %v158 = vunpack.c.h.b16 %v58
    %v159 = vunpack.c.l.b16 %v59
    %v160 = vunpack.c.h.b16 %v59
    %v161 = vunpack.c.l.b16 %v60
    %v162 = vunpack.c.l.b16 %v61
    %v163 = vunpack.c.h.b16 %v61
    %v164 = vunpack.c.l.b16 %v62
    %v165 = vunpack.c.h.b16 %v62
    %v166 = vunpack.c.l.b16 %v63
    %v167 = vunpack.c.h.b16 %v63
    %v168 = vunpack.c.l.b16 %v64
    %v169 = vunpack.c.h.b16 %v64
    %v170 = vunpack.c.l.b16 %v65
    %v171 = vunpack.c.h.b16 %v65
    %v172 = vunpack.c.l.b16 %v66
    %v173 = vunpack.c.l.b16 %v67
    %v174 = vunpack.c.h.b16 %v67
    %v175 = vunpack.c.l.b16 %v68
    %v176 = vunpack.c.h.b16 %v68
    %v177 = vunpack.c.l.b16 %v69
    %v178 = vunpack.c.h.b16 %v69
    %v179 = vunpack.c.l.b16 %v70
    %v180 = vunpack.c.h.b16 %v70
    %v181 = vunpack.c.l.b16 %v71
    %v182 = vunpack.c.h.b16 %v71
    %v183 = vunpack.c.l.b16 %v72
    %v184 = vunpack.c.l.b16 %v73
    %v185 = vunpack.c.h.b16 %v73
    %v186 = vunpack.c.l.b16 %v74
    %v187 = vunpack.c.h.b16 %v74
    %v188 = vunpack.c.l.b16 %v75
    %v189 = vunpack.c.h.b16 %v75
    %v190 = vunpack.c.l.b16 %v76
    %v191 = vunpack.c.h.b16 %v76
    %v192 = vunpack.c.l.b16 %v77
    %v193 = vunpack.c.h.b16 %v77
    %v194 = vunpack.c.l.b16 %v78
    %v195 = vunpack.c.l.b16 %v79
    %v196 = vunpack.c.h.b16 %v79
    %v197 = vunpack.c.l.b16 %v80
    %v198 = vunpack.c.h.b16 %v80
    %v199 = vunpack.c.l.b16 %v81
    %v200 = vunpack.c.h.b16 %v81
    %v201 = vunpack.c.l.b16 %v82
    %v202 = vunpack.c.h.b16 %v82
    %v203 = vunpack.c.l.b16 %v83
    %v204 = vunpack.c.h.b16 %v83
    %v205 = vunpack.c.l.b16 %v84
    %v206 = vpack.c.b16 %v140, %v129
    %v207 = vpack.c.b16 %v141, %v130
    %v208 = vpack.c.b16 %v142, %v131
    %v209 = vpack.c.b16 %v143, %v132
    %v210 = vpack.c.b16 %v144, %v133
    %v211 = vpack.c.b16 %v145, %v134
    %v212 = vpack.c.b16 %v146, %v135
    %v213 = vpack.c.b16 %v147, %v136
    %v214 = vpack.c.b16 %v148, %v137
    %v215 = vpack.c.b16 %v149, %v138
    %v216 = vpack.c.b16 %v150, %v139
    %v217 = vpack.c.b16 %v162, %v151
    %v218 = vpack.c.b16 %v163, %v152
    %v219 = vpack.c.b16 %v164, %v153
    %v220 = vpack.c.b16 %v165, %v154
    %v221 = vpack.c.b16 %v166, %v155
    %v222 = vpack.c.b16 %v167, %v156
    %v223 = vpack.c.b16 %v168, %v157
    %v224 = vpack.c.b16 %v169, %v158
    %v225 = vpack.c.b16 %v170, %v159
    %v226 = vpack.c.b16 %v171, %v160
    %v227 = vpack.c.b16 %v172, %v161
    %v228 = vpack.c.b16 %v184, %v173
    %v229 = vpack.c.b16 %v185, %v174
    %v230 = vpack.c.b16 %v186, %v175
    %v231 = vpack.c.b16 %v187, %v176
    %v232 = vpack.c.b16 %v188, %v177
    %v233 = vpack.c.b16 %v189, %v178
    %v234 = vpack.c.b16 %v190, %v179
    %v235 = vpack.c.b16 %v191, %v180
    %v236 = vpack.c.b16 %v192, %v181
    %v237 = vpack.c.b16 %v193, %v182
    %v238 = vpack.c.b16 %v194, %v183
    %v239 = vpack.c.b16 %v195, %v195
    %v240 = vpack.c.b16 %v196, %v196
    %v241 = vpack.c.b16 %v197, %v197
    %v242 = vpack.c.b16 %v198, %v198
    %v243 = vpack.c.b16 %v199, %v199
    %v244 = vpack.c.b16 %v200, %v200
    %v245 = vpack.c.b16 %v201, %v201
    %v246 = vpack.c.b16 %v202, %v202
    %v247 = vpack.c.b16 %v203, %v203
    %v248 = vpack.c.b16 %v204, %v204
    %v249 = vpack.c.b16 %v205, %v205
    %v285 = vlaneseq
    %v286 = vshrl.u32 %v285, 7
    %v287 = vsub.s32 0, %v286
    %v288 = vrot.slane %v85, %v287
    %v289 = vlaneseq
    %v290 = vshrl.u32 %v289, 7
    %v291 = vsub.s32 1, %v290
    %v292 = vrot.slane %v85, %v291
    %v293 = vlaneseq
    %v294 = vshrl.u32 %v293, 7
    %v295 = vsub.s32 2, %v294
    %v296 = vrot.slane %v85, %v295
    %v297 = vlaneseq
    %v298 = vshrl.u32 %v297, 7
    %v299 = vsub.s32 3, %v298
    %v300 = vrot.slane %v85, %v299
    %v301 = vlaneseq
    %v302 = vshrl.u32 %v301, 7
    %v303 = vsub.s32 4, %v302
    %v304 = vrot.slane %v85, %v303
    %v305 = vlaneseq
    %v306 = vshrl.u32 %v305, 7
    %v307 = vsub.s32 5, %v306
    %v308 = vrot.slane %v85, %v307
    %v309 = vlaneseq
    %v310 = vshrl.u32 %v309, 7
    %v311 = vsub.s32 6, %v310
    %v312 = vrot.slane %v85, %v311
    %v313 = vlaneseq
    %v314 = vshrl.u32 %v313, 7
    %v315 = vsub.s32 7, %v314
    %v316 = vrot.slane %v85, %v315
    %v317 = vlaneseq
    %v318 = vshrl.u32 %v317, 7
    %v319 = vsub.s32 0, %v318
    %v320 = vrot.slane %v86, %v319
    %v321 = vlaneseq
    %v322 = vshrl.u32 %v321, 7
    %v323 = vsub.s32 1, %v322
    %v324 = vrot.slane %v86, %v323
    %v325 = vlaneseq
    %v326 = vshrl.u32 %v325, 7
    %v327 = vsub.s32 2, %v326
    %v328 = vrot.slane %v86, %v327
    %vm340 = vcmask 457728
    %v342 = vsel %vm340, %v42, 0
    %vm344 = vcmask 1043456
    %v346 = vsel %vm344, %v239, 0
    %v349 = vsel %vm344, %v240, 0
    %v352 = vsel %vm344, %v241, 0
    %v355 = vsel %vm344, %v242, 0
    %v358 = vsel %vm344, %v243, 0
    %v361 = vsel %vm344, %v244, 0
    %v364 = vsel %vm344, %v245, 0
    %v367 = vsel %vm344, %v246, 0
    %v370 = vsel %vm344, %v247, 0
    %v373 = vsel %vm344, %v248, 0
    %v376 = vsel %vm344, %v249, 0
    %378 = vmatprep.subr.bf16.mxu0 0
    %379 = vmatpush1.bf16.msra.mxu0 0
    %380 = vmatprep.subr.bf16.mxu0 0
    %381 = vmatpush1.bf16.msra.mxu0 0
    %382 = vmatprep.subr.bf16.mxu0 0
    %383 = vmatpush1.bf16.msra.mxu0 0
    %384 = vmatprep.subr.bf16.mxu0 0
    %385 = vmatpush1.bf16.msra.mxu0 0
    %386 = vmatprep.subr.bf16.mxu0 %v349
    %387 = vmatpush1.bf16.msra.mxu0 %v346
    %388 = vmatprep.subr.bf16.mxu0 %v229
    %389 = vmatpush1.bf16.msra.mxu0 %v228
    %390 = vmatprep.subr.bf16.mxu0 %v218
    %391 = vmatpush1.bf16.msra.mxu0 %v217
    %392 = vmatprep.subr.bf16.mxu0 %v207
    %393 = vmatpush1.bf16.msra.mxu0 %v206
    %394 = vmatprep.subr.bf16.mxu0 0
    %395 = vmatpush2.bf16.msra.mxu0 0
    %396 = vmatprep.subr.bf16.mxu0 0
    %397 = vmatpush2.bf16.msra.mxu0 0
    %398 = vmatprep.subr.bf16.mxu0 0
    %399 = vmatpush2.bf16.msra.mxu0 0
    %400 = vmatprep.subr.bf16.mxu0 0
    %401 = vmatpush2.bf16.msra.mxu0 0
    %402 = vmatprep.subr.bf16.mxu0 0
    %403 = vmatpush2.bf16.msra.mxu0 0
    %404 = vmatprep.subr.bf16.mxu0 0
    %405 = vmatpush2.bf16.msra.mxu0 0
    %406 = vmatprep.subr.bf16.mxu0 0
    %407 = vmatpush2.bf16.msra.mxu0 0
    %408 = vmatprep.subr.bf16.mxu0 0
    %409 = vmatpush2.bf16.msra.mxu0 0
    %410 = vmatprep.mubr.bf16.mxu0 0
    %411 = vmatmul.mubr.bf16.gmra.mxu0 %v342
    %v412 = vpop.f32.mrf.mxu0
    %v413 = vadd.f32 %v288, %v412
    %v414 = vpop.f32.mrf.mxu0
    %v415 = vadd.f32 %v292, %v414
    %v416 = vpop.f32.mrf.mxu0
    %v417 = vpop.f32.mrf.mxu0
    %418 = vdwg.mxu0
    %419 = vmatprep.subr.bf16.mxu0 0
    %420 = vmatpush1.bf16.msra.mxu0 0
    %421 = vmatprep.subr.bf16.mxu0 0
    %422 = vmatpush1.bf16.msra.mxu0 0
    %423 = vmatprep.subr.bf16.mxu0 0
    %424 = vmatpush1.bf16.msra.mxu0 0
    %425 = vmatprep.subr.bf16.mxu0 0
    %426 = vmatpush1.bf16.msra.mxu0 0
    %427 = vmatprep.subr.bf16.mxu0 %v355
    %428 = vmatpush1.bf16.msra.mxu0 %v352
    %429 = vmatprep.subr.bf16.mxu0 %v231
    %430 = vmatpush1.bf16.msra.mxu0 %v230
    %431 = vmatprep.subr.bf16.mxu0 %v220
    %432 = vmatpush1.bf16.msra.mxu0 %v219
    %433 = vmatprep.subr.bf16.mxu0 %v209
    %434 = vmatpush1.bf16.msra.mxu0 %v208
    %435 = vmatprep.subr.bf16.mxu0 0
    %436 = vmatpush2.bf16.msra.mxu0 0
    %437 = vmatprep.subr.bf16.mxu0 0
    %438 = vmatpush2.bf16.msra.mxu0 0
    %439 = vmatprep.subr.bf16.mxu0 0
    %440 = vmatpush2.bf16.msra.mxu0 0
    %441 = vmatprep.subr.bf16.mxu0 0
    %442 = vmatpush2.bf16.msra.mxu0 0
    %443 = vmatprep.subr.bf16.mxu0 0
    %444 = vmatpush2.bf16.msra.mxu0 0
    %445 = vmatprep.subr.bf16.mxu0 0
    %446 = vmatpush2.bf16.msra.mxu0 0
    %447 = vmatprep.subr.bf16.mxu0 0
    %448 = vmatpush2.bf16.msra.mxu0 0
    %449 = vmatprep.subr.bf16.mxu0 0
    %450 = vmatpush2.bf16.msra.mxu0 0
    %451 = vmatprep.mubr.bf16.mxu0 0
    %452 = vmatmul.mubr.bf16.gmra.mxu0 %v342
    %v453 = vpop.f32.mrf.mxu0
    %v454 = vadd.f32 %v296, %v453
    %v455 = vpop.f32.mrf.mxu0
    %v456 = vadd.f32 %v300, %v455
    %v457 = vpop.f32.mrf.mxu0
    %v458 = vpop.f32.mrf.mxu0
    %459 = vdwg.mxu0
    %460 = vmatprep.subr.bf16.mxu0 0
    %461 = vmatpush1.bf16.msra.mxu0 0
    %462 = vmatprep.subr.bf16.mxu0 0
    %463 = vmatpush1.bf16.msra.mxu0 0
    %464 = vmatprep.subr.bf16.mxu0 0
    %465 = vmatpush1.bf16.msra.mxu0 0
    %466 = vmatprep.subr.bf16.mxu0 0
    %467 = vmatpush1.bf16.msra.mxu0 0
    %468 = vmatprep.subr.bf16.mxu0 %v361
    %469 = vmatpush1.bf16.msra.mxu0 %v358
    %470 = vmatprep.subr.bf16.mxu0 %v233
    %471 = vmatpush1.bf16.msra.mxu0 %v232
    %472 = vmatprep.subr.bf16.mxu0 %v222
    %473 = vmatpush1.bf16.msra.mxu0 %v221
    %474 = vmatprep.subr.bf16.mxu0 %v211
    %475 = vmatpush1.bf16.msra.mxu0 %v210
    %476 = vmatprep.subr.bf16.mxu0 0
    %477 = vmatpush2.bf16.msra.mxu0 0
    %478 = vmatprep.subr.bf16.mxu0 0
    %479 = vmatpush2.bf16.msra.mxu0 0
    %480 = vmatprep.subr.bf16.mxu0 0
    %481 = vmatpush2.bf16.msra.mxu0 0
    %482 = vmatprep.subr.bf16.mxu0 0
    %483 = vmatpush2.bf16.msra.mxu0 0
    %484 = vmatprep.subr.bf16.mxu0 0
    %485 = vmatpush2.bf16.msra.mxu0 0
    %486 = vmatprep.subr.bf16.mxu0 0
    %487 = vmatpush2.bf16.msra.mxu0 0
    %488 = vmatprep.subr.bf16.mxu0 0
    %489 = vmatpush2.bf16.msra.mxu0 0
    %490 = vmatprep.subr.bf16.mxu0 0
    %491 = vmatpush2.bf16.msra.mxu0 0
    %492 = vmatprep.mubr.bf16.mxu0 0
    %493 = vmatmul.mubr.bf16.gmra.mxu0 %v342
    %v494 = vpop.f32.mrf.mxu0
    %v495 = vadd.f32 %v304, %v494
    %v496 = vpop.f32.mrf.mxu0
    %v497 = vadd.f32 %v308, %v496
    %v498 = vpop.f32.mrf.mxu0
    %v499 = vpop.f32.mrf.mxu0
    %500 = vdwg.mxu0
    %501 = vmatprep.subr.bf16.mxu0 0
    %502 = vmatpush1.bf16.msra.mxu0 0
    %503 = vmatprep.subr.bf16.mxu0 0
    %504 = vmatpush1.bf16.msra.mxu0 0
    %505 = vmatprep.subr.bf16.mxu0 0
    %506 = vmatpush1.bf16.msra.mxu0 0
    %507 = vmatprep.subr.bf16.mxu0 0
    %508 = vmatpush1.bf16.msra.mxu0 0
    %509 = vmatprep.subr.bf16.mxu0 %v367
    %510 = vmatpush1.bf16.msra.mxu0 %v364
    %511 = vmatprep.subr.bf16.mxu0 %v235
    %512 = vmatpush1.bf16.msra.mxu0 %v234
    %513 = vmatprep.subr.bf16.mxu0 %v224
    %514 = vmatpush1.bf16.msra.mxu0 %v223
    %515 = vmatprep.subr.bf16.mxu0 %v213
    %516 = vmatpush1.bf16.msra.mxu0 %v212
    %517 = vmatprep.subr.bf16.mxu0 0
    %518 = vmatpush2.bf16.msra.mxu0 0
    %519 = vmatprep.subr.bf16.mxu0 0
    %520 = vmatpush2.bf16.msra.mxu0 0
    %521 = vmatprep.subr.bf16.mxu0 0
    %522 = vmatpush2.bf16.msra.mxu0 0
    %523 = vmatprep.subr.bf16.mxu0 0
    %524 = vmatpush2.bf16.msra.mxu0 0
    %525 = vmatprep.subr.bf16.mxu0 0
    %526 = vmatpush2.bf16.msra.mxu0 0
    %527 = vmatprep.subr.bf16.mxu0 0
    %528 = vmatpush2.bf16.msra.mxu0 0
    %529 = vmatprep.subr.bf16.mxu0 0
    %530 = vmatpush2.bf16.msra.mxu0 0
    %531 = vmatprep.subr.bf16.mxu0 0
    %532 = vmatpush2.bf16.msra.mxu0 0
    %533 = vmatprep.mubr.bf16.mxu0 0
    %534 = vmatmul.mubr.bf16.gmra.mxu0 %v342
    %v535 = vpop.f32.mrf.mxu0
    %v536 = vadd.f32 %v312, %v535
    %v537 = vpop.f32.mrf.mxu0
    %v538 = vadd.f32 %v316, %v537
    %v539 = vpop.f32.mrf.mxu0
    %v540 = vpop.f32.mrf.mxu0
    %541 = vdwg.mxu0
    %542 = vmatprep.subr.bf16.mxu0 0
    %543 = vmatpush1.bf16.msra.mxu0 0
    %544 = vmatprep.subr.bf16.mxu0 0
    %545 = vmatpush1.bf16.msra.mxu0 0
    %546 = vmatprep.subr.bf16.mxu0 0
    %547 = vmatpush1.bf16.msra.mxu0 0
    %548 = vmatprep.subr.bf16.mxu0 0
    %549 = vmatpush1.bf16.msra.mxu0 0
    %550 = vmatprep.subr.bf16.mxu0 %v373
    %551 = vmatpush1.bf16.msra.mxu0 %v370
    %552 = vmatprep.subr.bf16.mxu0 %v237
    %553 = vmatpush1.bf16.msra.mxu0 %v236
    %554 = vmatprep.subr.bf16.mxu0 %v226
    %555 = vmatpush1.bf16.msra.mxu0 %v225
    %556 = vmatprep.subr.bf16.mxu0 %v215
    %557 = vmatpush1.bf16.msra.mxu0 %v214
    %558 = vmatprep.subr.bf16.mxu0 0
    %559 = vmatpush2.bf16.msra.mxu0 0
    %560 = vmatprep.subr.bf16.mxu0 0
    %561 = vmatpush2.bf16.msra.mxu0 0
    %562 = vmatprep.subr.bf16.mxu0 0
    %563 = vmatpush2.bf16.msra.mxu0 0
    %564 = vmatprep.subr.bf16.mxu0 0
    %565 = vmatpush2.bf16.msra.mxu0 0
    %566 = vmatprep.subr.bf16.mxu0 0
    %567 = vmatpush2.bf16.msra.mxu0 0
    %568 = vmatprep.subr.bf16.mxu0 0
    %569 = vmatpush2.bf16.msra.mxu0 0
    %570 = vmatprep.subr.bf16.mxu0 0
    %571 = vmatpush2.bf16.msra.mxu0 0
    %572 = vmatprep.subr.bf16.mxu0 0
    %573 = vmatpush2.bf16.msra.mxu0 0
    %574 = vmatprep.mubr.bf16.mxu0 0
    %575 = vmatmul.mubr.bf16.gmra.mxu0 %v342
    %v576 = vpop.f32.mrf.mxu0
    %v577 = vadd.f32 %v320, %v576
    %v578 = vpop.f32.mrf.mxu0
    %v579 = vadd.f32 %v324, %v578
    %v580 = vpop.f32.mrf.mxu0
    %v581 = vpop.f32.mrf.mxu0
    %582 = vdwg.mxu0
    %583 = vmatprep.subr.bf16.mxu0 0
    %584 = vmatpush1.bf16.msra.mxu0 0
    %585 = vmatprep.subr.bf16.mxu0 0
    %586 = vmatpush1.bf16.msra.mxu0 0
    %587 = vmatprep.subr.bf16.mxu0 0
    %588 = vmatpush1.bf16.msra.mxu0 0
    %589 = vmatprep.subr.bf16.mxu0 0
    %590 = vmatpush1.bf16.msra.mxu0 0
    %591 = vmatprep.subr.bf16.mxu0 0
    %592 = vmatpush1.bf16.msra.mxu0 %v376
    %593 = vmatprep.subr.bf16.mxu0 0
    %594 = vmatpush1.bf16.msra.mxu0 %v238
    %595 = vmatprep.subr.bf16.mxu0 0
    %596 = vmatpush1.bf16.msra.mxu0 %v227
    %597 = vmatprep.subr.bf16.mxu0 0
    %598 = vmatpush1.bf16.msra.mxu0 %v216
    %599 = vmatprep.subr.bf16.mxu0 0
    %600 = vmatpush2.bf16.msra.mxu0 0
    %601 = vmatprep.subr.bf16.mxu0 0
    %602 = vmatpush2.bf16.msra.mxu0 0
    %603 = vmatprep.subr.bf16.mxu0 0
    %604 = vmatpush2.bf16.msra.mxu0 0
    %605 = vmatprep.subr.bf16.mxu0 0
    %606 = vmatpush2.bf16.msra.mxu0 0
    %607 = vmatprep.subr.bf16.mxu0 0
    %608 = vmatpush2.bf16.msra.mxu0 0
    %609 = vmatprep.subr.bf16.mxu0 0
    %610 = vmatpush2.bf16.msra.mxu0 0
    %611 = vmatprep.subr.bf16.mxu0 0
    %612 = vmatpush2.bf16.msra.mxu0 0
    %613 = vmatprep.subr.bf16.mxu0 0
    %614 = vmatpush2.bf16.msra.mxu0 0
    %615 = vmatprep.mubr.bf16.mxu0 0
    %616 = vmatmul.mubr.bf16.gmra.mxu0 %v342
    %v617 = vpop.f32.mrf.mxu0
    %v618 = vadd.f32 %v328, %v617
    %v619 = vpop.f32.mrf.mxu0
    %v620 = vpop.f32.mrf.mxu0
    %v621 = vpop.f32.mrf.mxu0
    %622 = vdwg.mxu0
    %v623 = vmul.f32 %v413, 0.5
    %v624 = vmul.f32 %v415, 0.5
    %v625 = vmul.f32 %v454, 0.5
    %v626 = vmul.f32 %v456, 0.5
    %v627 = vmul.f32 %v495, 0.5
    %v628 = vmul.f32 %v497, 0.5
    %v629 = vmul.f32 %v536, 0.5
    %v630 = vmul.f32 %v538, 0.5
    %v631 = vmul.f32 %v577, 0.5
    %v632 = vmul.f32 %v579, 0.5
    %v633 = vmul.f32 %v618, 0.5
    %v634 = vtanh.pop %v623
    %v635 = vtanh.pop %v624
    %v636 = vtanh.pop %v625
    %v637 = vtanh.pop %v626
    %v638 = vtanh.pop %v627
    %v639 = vtanh.pop %v628
    %v640 = vtanh.pop %v629
    %v641 = vtanh.pop %v630
    %v642 = vtanh.pop %v631
    %v643 = vtanh.pop %v632
    %v644 = vtanh.pop %v633
    %v645 = vmul.f32 %v634, 0.5
    %v646 = vmul.f32 %v635, 0.5
    %v647 = vmul.f32 %v636, 0.5
    %v648 = vmul.f32 %v637, 0.5
    %v649 = vmul.f32 %v638, 0.5
    %v650 = vmul.f32 %v639, 0.5
    %v651 = vmul.f32 %v640, 0.5
    %v652 = vmul.f32 %v641, 0.5
    %v653 = vmul.f32 %v642, 0.5
    %v654 = vmul.f32 %v643, 0.5
    %v655 = vmul.f32 %v644, 0.5
    %v656 = vadd.f32 %v645, 0.5
    %v657 = vadd.f32 %v646, 0.5
    %v658 = vadd.f32 %v647, 0.5
    %v659 = vadd.f32 %v648, 0.5
    %v660 = vadd.f32 %v649, 0.5
    %v661 = vadd.f32 %v650, 0.5
    %v662 = vadd.f32 %v651, 0.5
    %v663 = vadd.f32 %v652, 0.5
    %v664 = vadd.f32 %v653, 0.5
    %v665 = vadd.f32 %v654, 0.5
    %v666 = vadd.f32 %v655, 0.5
    %v678 = vcombine.low %v656, %v657
    %v679 = vcombine.low %v658, %v659
    %v680 = vcombine.low %v660, %v661
    %v681 = vcombine.low %v662, %v663
    %v683 = vunpack.c.l.s4 1966171168
    %v684 = vunpack.c.0.s8 %v683
    %v685 = vlaneseq
    %v686 = vshrl.u32 %v685, 7
    %v687 = vsub.s32 %v684, %v686
    %v688 = vrot.slane %v678, %v687
    %v690 = vunpack.c.l.s4 1966171168
    %v691 = vunpack.c.0.s8 %v690
    %v692 = vlaneseq
    %v693 = vshrl.u32 %v692, 7
    %v694 = vsub.s32 %v691, %v693
    %v695 = vrot.slane %v679, %v694
    %v697 = vunpack.c.l.s4 1966171168
    %v698 = vunpack.c.0.s8 %v697
    %v699 = vlaneseq
    %v700 = vshrl.u32 %v699, 7
    %v701 = vsub.s32 %v698, %v700
    %v702 = vrot.slane %v680, %v701
    %v704 = vunpack.c.l.s4 1966171168
    %v705 = vunpack.c.0.s8 %v704
    %v706 = vlaneseq
    %v707 = vshrl.u32 %v706, 7
    %v708 = vsub.s32 %v705, %v707
    %v709 = vrot.slane %v681, %v708
    %v710 = vcombine.low %v688, %v695
    %v711 = vcombine.low %v702, %v709
    %v713 = vunpack.c.l.s4 1966171168
    %v714 = vunpack.c.0.s8 %v713
    %v715 = vlaneseq
    %v716 = vshrl.u32 %v715, 7
    %v717 = vsub.s32 %v714, %v716
    %v718 = vrot.slane %v710, %v717
    %v720 = vunpack.c.l.s4 1966171168
    %v721 = vunpack.c.0.s8 %v720
    %v722 = vlaneseq
    %v723 = vshrl.u32 %v722, 7
    %v724 = vsub.s32 %v721, %v723
    %v725 = vrot.slane %v711, %v724
    %v726 = vcombine.low %v718, %v725
    %v727 = vcombine.low %v664, %v665
    %v729 = vunpack.c.l.s4 1966171168
    %v730 = vunpack.c.0.s8 %v729
    %v731 = vlaneseq
    %v732 = vshrl.u32 %v731, 7
    %v733 = vsub.s32 %v730, %v732
    %v734 = vrot.slane %v727, %v733
    %v736 = vunpack.c.l.s4 1966171168
    %v737 = vunpack.c.0.s8 %v736
    %v738 = vlaneseq
    %v739 = vshrl.u32 %v738, 7
    %v740 = vsub.s32 %v737, %v739
    %v741 = vrot.slane %v666, %v740
    %v742 = vcombine.low %v734, %v741
    %v744 = vunpack.c.l.s4 1966171168
    %v745 = vunpack.c.0.s8 %v744
    %v746 = vlaneseq
    %v747 = vshrl.u32 %v746, 7
    %v748 = vsub.s32 %v745, %v747
    %v749 = vrot.slane %v742, %v748
    %752 = vst [vmem:[%s3] sm:$0xff] %v726
    %v753 = vlaneseq
    %vm754 = vcmp.ge.s32.totalorder %v753, 0
    %vm755 = vcmp.lt.s32.totalorder %v753, 384
    %vm756 = vmand %vm754, %vm755
    %757 = vst.msk [vmem:[%s3 + $0x8] sm:$0x7] %vm756, %v749
    // Predicated region
    $region22: #{conv1x1_sigmoid.1} parent=1 // pred_check
      _
    $region23: #{conv1x1_sigmoid.1} parent=1 // pred_check_branch
      %759 = sbr.rel (0) target = $region25
    $region24: #{conv1x1_sigmoid.1} parent=1 // pred_region
      _
    $region25: #{conv1x1_sigmoid.1} parent=1 // pred_fallthru
      _
    // Predicated region
    $region26: #{conv1x1_sigmoid.1} parent=1 // pred_check
      _
    $region27: #{conv1x1_sigmoid.1} parent=1 // pred_check_branch
      %761 = sbr.rel (0) target = $region29
    $region28: #{conv1x1_sigmoid.1} parent=1 // pred_region
      _
    $region29: #{conv1x1_sigmoid.1} parent=1 // pred_fallthru
      _
    %762 = vsyncpa [#allocation3], 1
    %763 = vsyncpa [#allocation5], 1

</llo_original>
